<compile_context>
chip_gen: v7x
topology: tpu7x:2x2x1
jax: 0.10.0
libtpu: 0.0.40
codegen_flags: <defaults>
</compile_context>

<pallas_src>
import functools

import jax
import jax.numpy as jnp
from jax import lax
from jax.experimental import pallas as pl
from jax.experimental.pallas import tpu as pltpu


_NEG_MASK = -1e9     # matches torch masked_fill value
_NEG_PAD = -1e30     # padded (fake) key columns: far below -1e9 so fully-masked rows match torch


def _round_up(x, m):
    return ((x + m - 1) // m) * m


def _cdiv(a, b):
    return -(-a // b)


def _sdpa_kernel(*refs, inv_temp, lk, lk_pad, has_mask, with_attn, compute_dtype):
    idx = 0
    q_ref = refs[idx]; idx += 1
    k_ref = refs[idx]; idx += 1
    v_ref = refs[idx]; idx += 1
    mask_ref = None
    if has_mask:
        mask_ref = refs[idx]; idx += 1
    out_ref = refs[idx]; idx += 1
    attn_ref = refs[idx] if with_attn else None

    # Scale the small q tile (TQ*Dp muls < TQ*Lkp) and hand the MXU compute_dtype (bf16) operands.
    q = (q_ref[0].astype(jnp.float32) * inv_temp).astype(compute_dtype)   # (TQ, Dp)
    k = k_ref[0]                                                          # (Lkp, Dp)  compute_dtype
    v = v_ref[0]                                                          # (Lkp, Dvp) compute_dtype

    # scores = (q/temperature) @ k^T without materializing k.T; accumulate in f32.
    s = lax.dot_general(
        q, k,
        dimension_numbers=(((1,), (1,)), ((), ())),
        preferred_element_type=jnp.float32,
    )                                                                     # (TQ, Lkp) f32

    if has_mask:
        s = jnp.where(mask_ref[0] == 0, jnp.float32(_NEG_MASK), s)

    if lk_pad != lk:
        # One broadcast add of a (1, Lkp) bias row instead of full-tile iota/cmp/select passes.
        col = lax.broadcasted_iota(jnp.int32, (1, lk_pad), 1)
        pad_bias = jnp.where(col < lk, 0.0, _NEG_PAD).astype(jnp.float32)
        s = s + pad_bias

    # Numerically-stable softmax.
    m = jnp.max(s, axis=-1, keepdims=True)
    e = jnp.exp(s - m)
    denom = jnp.sum(e, axis=-1, keepdims=True)        # >= 1, never zero

    if with_attn:
        p = e / denom                                 # exact: returned rows must sum to 1
        attn_ref[0] = p.astype(attn_ref.dtype)
    else:
        p = e * pl.reciprocal(denom, approx=True)     # EUP slot, output-only fast path

    out_ref[0] = jnp.dot(
        p.astype(compute_dtype), v, preferred_element_type=jnp.float32
    ).astype(out_ref.dtype)


def scaled_dot_product_attention(q, k, v, temperature, mask=None, *,
                                 return_attn=True,
                                 q_tile_max=256,          # consider 128 on v5e for large Lk
                                 attn_dtype=jnp.bfloat16,
                                 compute_dtype=jnp.bfloat16):
    """Pallas implementation of ScaledDotProductAttention.forward (eval mode)."""
    B, Lq, D = q.shape
    Bk, Lk, Dk = k.shape
    Bv, Lkv, Dv = v.shape
    assert (Bk, Dk) == (B, D), "k shape mismatch"
    assert (Bv, Lkv) == (B, Lk), "v shape mismatch"
    assert Lk >= 1

    # --- lane-dense / sublane-aligned padded shapes --------------------------
    Dp = _round_up(D, 128)          # q/k feature (lane) dim
    Dvp = _round_up(Dv, 128)        # output lane dim
    Lkp = _round_up(Lk, 128)        # attention-weights lane dim

    # Lq rounded to a multiple of 32 so every tile dtype (f32/bf16/int8) has a legal
    # sublane multiple; TQ chosen to minimise padded rows instead of rounding to 256.
    Lq32 = _round_up(Lq, 32)
    if Lq32 <= q_tile_max:
        TQ = Lq32
        num_q_tiles = 1
    else:
        num_q_tiles = _cdiv(Lq32, q_tile_max)
        TQ = _round_up(_cdiv(Lq32, num_q_tiles), 32)

    has_mask = mask is not None
    q_isz = jnp.dtype(q.dtype).itemsize
    kv_isz = jnp.dtype(compute_dtype).itemsize
    attn_isz = jnp.dtype(attn_dtype).itemsize

    def footprint(tq):
        b = 2 * tq * Dp * q_isz            # q tile (double-buffered)
        b += 2 * Lkp * Dp * kv_isz         # resident K (pipeline still double-buffers)
        b += 2 * Lkp * Dvp * kv_isz        # resident V
        b += 2 * tq * Dvp * q_isz          # out tile
        if has_mask:
            b += 2 * tq * Lkp * 1          # int8 mask tile
        if return_attn:
            b += 2 * tq * Lkp * attn_isz   # attn tile
        b += 4 * tq * Lkp * 4              # s / e / p f32 live temporaries (rough)
        return b

    VMEM_BUDGET = 40 * 1024 * 1024         # conservative for v7x (64 MiB physical VMEM/TC)
    while footprint(TQ) > VMEM_BUDGET and TQ > 32:
        TQ = max(32, _round_up(TQ // 2, 32))
        num_q_tiles = _cdiv(Lq32, TQ)
    Lqp = TQ * num_q_tiles
    vmem_limit = int(min(max(footprint(TQ) + 8 * 1024 * 1024, 32 * 1024 * 1024),
                         64 * 1024 * 1024))

    # --- pad (and cast K/V to the MXU compute dtype while we already copy) ---
    def pad3(x, d1, d2, cval=0, dtype=None):
        s = x.shape
        if s[1] != d1 or s[2] != d2:
            x = jnp.pad(x, ((0, 0), (0, d1 - s[1]), (0, d2 - s[2])),
                        constant_values=cval)
        if dtype is not None and x.dtype != dtype:
            x = x.astype(dtype)
        return x

    qp = pad3(q, Lqp, Dp)                          # scaled + cast in-kernel
    kp = pad3(k, Lkp, Dp, dtype=compute_dtype)     # bf16: halves K DMA + resident VMEM
    vp = pad3(v, Lkp, Dvp, dtype=compute_dtype)

    in_specs = [
        pl.BlockSpec((1, TQ, Dp), lambda b, qi: (b, qi, 0)),      # q tile
        pl.BlockSpec((1, Lkp, Dp), lambda b, qi: (b, 0, 0)),      # k: resident per batch
        pl.BlockSpec((1, Lkp, Dvp), lambda b, qi: (b, 0, 0)),     # v: resident per batch
    ]
    args = [qp, kp, vp]

    if has_mask:
        assert mask.shape == (B, Lq, Lk), "mask must be (B, Lq, Lk)"
        # int8 mask; padded entries = 1 ("keep") -- padded key columns are handled by the
        # in-kernel pad bias so fully-masked real rows still match torch semantics.
        mp = pad3((mask != 0).astype(jnp.int8), Lqp, Lkp, cval=1)
        args.append(mp)
        in_specs.append(pl.BlockSpec((1, TQ, Lkp), lambda b, qi: (b, qi, 0)))

    out_shapes = [jax.ShapeDtypeStruct((B, Lqp, Dvp), q.dtype)]
    out_specs = [pl.BlockSpec((1, TQ, Dvp), lambda b, qi: (b, qi, 0))]
    if return_attn:
        out_shapes.append(jax.ShapeDtypeStruct((B, Lqp, Lkp), attn_dtype))
        out_specs.append(pl.BlockSpec((1, TQ, Lkp), lambda b, qi: (b, qi, 0)))

    kernel = functools.partial(
        _sdpa_kernel,
        inv_temp=float(1.0 / float(temperature)),
        lk=Lk, lk_pad=Lkp,
        has_mask=has_mask, with_attn=return_attn,
        compute_dtype=compute_dtype,
    )

    outs = pl.pallas_call(
        kernel,
        out_shape=tuple(out_shapes),
        grid_spec=pltpu.PrefetchScalarGridSpec(
            num_scalar_prefetch=0,
            grid=(B, num_q_tiles),
            in_specs=in_specs,
            out_specs=tuple(out_specs),
        ),
        compiler_params=pltpu.CompilerParams(
            dimension_semantics=("parallel", "parallel"),
            vmem_limit_bytes=vmem_limit,
        ),
    )(*args)

    out = outs[0]
    if (Lqp, Dvp) != (Lq, Dv):
        out = out[:, :Lq, :Dv]
    if not return_attn:
        return out
    attn = outs[1]
    if (Lqp, Lkp) != (Lq, Lk):
        attn = attn[:, :Lq, :Lk]
    return out, attn


def _reference(q, k, v, temperature, mask=None):
    """Pure-JAX reference mirroring the PyTorch forward (eval mode, f32)."""
    attn = jnp.matmul(q / temperature, jnp.transpose(k, (0, 2, 1)))
    if mask is not None:
        attn = jnp.where(mask == 0, -1e9, attn)
    attn = jax.nn.softmax(attn, axis=-1)
    out = jnp.matmul(attn, v)
    return out, attn


if __name__ == "__main__":
    key = jax.random.PRNGKey(0)
    kq, kk, kv, km, kq2, kk2, kv2 = jax.random.split(key, 7)

    # bf16 MXU operands + bf16 attn writeback => compare against the f32 reference
    # with tolerances sized for bf16 rounding (~0.4% per operand) through two matmuls.
    ATOL = RTOL = 5e-2

    # --- small case matching the module's typical use ------------------------
    B, Lq, Lk, D, Dv = 2, 8, 8, 32, 32
    temperature = float(D) ** 0.5

    q = jax.random.normal(kq, (B, Lq, D), dtype=jnp.float32)
    k = jax.random.normal(kk, (B, Lk, D), dtype=jnp.float32)
    v = jax.random.normal(kv, (B, Lk, Dv), dtype=jnp.float32)

    out, attn = scaled_dot_product_attention(q, k, v, temperature)
    out = jax.block_until_ready(out)
    attn = jax.block_until_ready(attn)
    ref_out, ref_attn = _reference(q, k, v, temperature)
    assert jnp.allclose(out, ref_out, atol=ATOL, rtol=RTOL), "output mismatch (unmasked)"
    assert jnp.allclose(attn.astype(jnp.float32), ref_attn, atol=ATOL, rtol=RTOL), \
        "attn mismatch (unmasked)"

    # --- masked case ----------------------------------------------------------
    mask = (jax.random.uniform(km, (B, Lq, Lk)) > 0.3).astype(jnp.int32)
    out_m, attn_m = scaled_dot_product_attention(q, k, v, temperature, mask=mask)
    out_m = jax.block_until_ready(out_m)
    ref_out_m, ref_attn_m = _reference(q, k, v, temperature, mask=mask)
    assert jnp.allclose(out_m, ref_out_m, atol=ATOL, rtol=RTOL), "output mismatch (masked)"
    assert jnp.allclose(attn_m.astype(jnp.float32), ref_attn_m, atol=ATOL, rtol=RTOL), \
        "attn mismatch (masked)"

    # --- case exercising the Lq-tiled grid (2 q-tiles of 256) -----------------
    B2, Lq2, Lk2, D2, Dv2 = 2, 512, 128, 64, 64
    temperature2 = float(D2) ** 0.5
    q2 = jax.random.normal(kq2, (B2, Lq2, D2), dtype=jnp.float32)
    k2 = jax.random.normal(kk2, (B2, Lk2, D2), dtype=jnp.float32)
    v2 = jax.random.normal(kv2, (B2, Lk2, Dv2), dtype=jnp.float32)
    out2, attn2 = scaled_dot_product_attention(q2, k2, v2, temperature2)
    out2 = jax.block_until_ready(out2)
    ref_out2, ref_attn2 = _reference(q2, k2, v2, temperature2)
    assert jnp.allclose(out2, ref_out2, atol=ATOL, rtol=RTOL), "output mismatch (tiled)"
    assert jnp.allclose(attn2.astype(jnp.float32), ref_attn2, atol=ATOL, rtol=RTOL), \
        "attn mismatch (tiled)"

    # --- output-only fast path (no O(Lq*Lk) attention write-back) -------------
    out_only = scaled_dot_product_attention(q2, k2, v2, temperature2, return_attn=False)
    out_only = jax.block_until_ready(out_only)
    assert jnp.allclose(out_only, ref_out2, atol=ATOL, rtol=RTOL), "output mismatch (no-attn)"

    print("KERNEL_OK")
</pallas_src>

<mosaic_0001>
module attributes {stable_mosaic.version = 11 : i64} {
  func.func @_sdpa_kernel(%arg0: i32, %arg1: i32, %arg2: memref<1x32x128xf32, #tpu.memory_space<vmem>>, %arg3: memref<1x128x128xbf16, #tpu.memory_space<vmem>>, %arg4: memref<1x128x128xbf16, #tpu.memory_space<vmem>>, %arg5: memref<1x32x128xf32, #tpu.memory_space<vmem>>, %arg6: memref<1x32x128xbf16, #tpu.memory_space<vmem>>) attributes {dimension_semantics = [#tpu.dimension_semantics<parallel>, #tpu.dimension_semantics<parallel>], iteration_bounds = array<i64: 2, 1>, scalar_prefetch = 0 : i64, scratch_operands = 0 : i64, tpu.core_type = #tpu.core_type<tc>, window_params = [{transform_indices = @transform_0, window_bounds = array<i64: 1, 32, 128>}, {transform_indices = @transform_1, window_bounds = array<i64: 1, 128, 128>}, {transform_indices = @transform_2, window_bounds = array<i64: 1, 128, 128>}, {transform_indices = @transform_3, window_bounds = array<i64: 1, 32, 128>}, {transform_indices = @transform_4, window_bounds = array<i64: 1, 32, 128>}]} {
    %c0 = arith.constant 0 : index
    %c0_0 = arith.constant 0 : index
    %c0_1 = arith.constant 0 : index
    %0 = vector.load %arg2[%c0, %c0_0, %c0_1] : memref<1x32x128xf32, #tpu.memory_space<vmem>>, vector<1x32x128xf32>
    %1 = vector.shape_cast %0 : vector<1x32x128xf32> to vector<32x128xf32>
    %cst = arith.constant 0.176776692 : f32
    %2 = vector.broadcast %cst : f32 to vector<32x128xf32>
    %3 = arith.mulf %1, %2 : vector<32x128xf32>
    %4 = arith.truncf %3 : vector<32x128xf32> to vector<32x128xbf16>
    %c0_2 = arith.constant 0 : index
    %c0_3 = arith.constant 0 : index
    %c0_4 = arith.constant 0 : index
    %5 = vector.load %arg3[%c0_2, %c0_3, %c0_4] : memref<1x128x128xbf16, #tpu.memory_space<vmem>>, vector<1x128x128xbf16>
    %6 = vector.shape_cast %5 : vector<1x128x128xbf16> to vector<128x128xbf16>
    %c0_5 = arith.constant 0 : index
    %c0_6 = arith.constant 0 : index
    %c0_7 = arith.constant 0 : index
    %7 = vector.load %arg4[%c0_5, %c0_6, %c0_7] : memref<1x128x128xbf16, #tpu.memory_space<vmem>>, vector<1x128x128xbf16>
    %8 = vector.shape_cast %7 : vector<1x128x128xbf16> to vector<128x128xbf16>
    %cst_8 = arith.constant dense<0.000000e+00> : vector<32x128xf32>
    %9 = tpu.matmul %4, %6, %cst_8 {dimension_numbers = #tpu.dot_dimension_numbers<[1], [1], [0], [0], [0, 0, 1, 0], [], []>} : vector<32x128xbf16>, vector<128x128xbf16>, vector<32x128xf32> -> vector<32x128xf32>
    %10 = tpu.iota {dimensions = array<i32: 1>} : vector<1x128xi32>
    %c8_i32 = arith.constant 8 : i32
    %11 = vector.broadcast %c8_i32 : i32 to vector<1x128xi32>
    %12 = arith.cmpi slt, %10, %11 : vector<1x128xi32>
    %cst_9 = arith.constant 0.000000e+00 : f32
    %cst_10 = arith.constant -1.000000e+30 : f32
    %13 = vector.broadcast %cst_9 : f32 to vector<1x128xf32>
    %14 = vector.broadcast %cst_10 : f32 to vector<1x128xf32>
    %15 = arith.select %12, %13, %14 : vector<1x128xi1>, vector<1x128xf32>
    %16 = vector.broadcast %15 : vector<1x128xf32> to vector<32x128xf32>
    %17 = arith.addf %9, %16 : vector<32x128xf32>
    %cst_11 = arith.constant dense<0xFF800000> : vector<32xf32>
    %18 = vector.multi_reduction <maximumf>, %17, %cst_11 [1] : vector<32x128xf32> to vector<32xf32>
    %19 = vector.shape_cast %18 : vector<32xf32> to vector<32x1xf32>
    %20 = vector.broadcast %19 : vector<32x1xf32> to vector<32x128xf32>
    %21 = arith.subf %17, %20 : vector<32x128xf32>
    %22 = math.exp %21 : vector<32x128xf32>
    %cst_12 = arith.constant dense<0.000000e+00> : vector<32xf32>
    %23 = vector.multi_reduction <add>, %22, %cst_12 [1] : vector<32x128xf32> to vector<32xf32>
    %24 = vector.shape_cast %23 : vector<32xf32> to vector<32x1xf32>
    %25 = vector.broadcast %24 : vector<32x1xf32> to vector<32x128xf32>
    %26 = arith.divf %22, %25 : vector<32x128xf32>
    %27 = arith.truncf %26 : vector<32x128xf32> to vector<32x128xbf16>
    %c0_13 = arith.constant 0 : index
    %c0_14 = arith.constant 0 : index
    %c0_15 = arith.constant 0 : index
    %28 = vector.load %arg6[%c0_13, %c0_14, %c0_15] : memref<1x32x128xbf16, #tpu.memory_space<vmem>>, vector<1x32x128xbf16>
    %29 = vector.shape_cast %28 : vector<1x32x128xbf16> to vector<32x128xbf16>
    %30 = vector.shape_cast %27 : vector<32x128xbf16> to vector<1x32x128xbf16>
    tpu.vector_store %arg6[%c0_13, %c0_14, %c0_15], %30 {strides = array<i32>} : memref<1x32x128xbf16, #tpu.memory_space<vmem>>, vector<1x32x128xbf16>,
    %31 = arith.truncf %26 : vector<32x128xf32> to vector<32x128xbf16>
    %cst_16 = arith.constant dense<0.000000e+00> : vector<32x128xf32>
    %32 = tpu.matmul %31, %8, %cst_16 {dimension_numbers = #tpu.dot_dimension_numbers<[1], [0], [0], [1], [0, 0, 1, 1], [], []>} : vector<32x128xbf16>, vector<128x128xbf16>, vector<32x128xf32> -> vector<32x128xf32>
    %c0_17 = arith.constant 0 : index
    %c0_18 = arith.constant 0 : index
    %c0_19 = arith.constant 0 : index
    %33 = vector.load %arg5[%c0_17, %c0_18, %c0_19] : memref<1x32x128xf32, #tpu.memory_space<vmem>>, vector<1x32x128xf32>
    %34 = vector.shape_cast %33 : vector<1x32x128xf32> to vector<32x128xf32>
    %35 = vector.shape_cast %32 : vector<32x128xf32> to vector<1x32x128xf32>
    tpu.vector_store %arg5[%c0_17, %c0_18, %c0_19], %35 {strides = array<i32>} : memref<1x32x128xf32, #tpu.memory_space<vmem>>, vector<1x32x128xf32>,
    return
  }
  func.func @transform_0(%arg0: i32, %arg1: i32) -> (i32, i32, i32) {
    %c0_i32 = arith.constant 0 : i32
    %c0_i32_0 = arith.constant 0 : i32
    return %arg0, %arg1, %c0_i32 : i32, i32, i32
  }
  func.func @transform_1(%arg0: i32, %arg1: i32) -> (i32, i32, i32) {
    %c0_i32 = arith.constant 0 : i32
    %c0_i32_0 = arith.constant 0 : i32
    %c0_i32_1 = arith.constant 0 : i32
    return %arg0, %c0_i32, %c0_i32_0 : i32, i32, i32
  }
  func.func @transform_2(%arg0: i32, %arg1: i32) -> (i32, i32, i32) {
    %c0_i32 = arith.constant 0 : i32
    %c0_i32_0 = arith.constant 0 : i32
    %c0_i32_1 = arith.constant 0 : i32
    return %arg0, %c0_i32, %c0_i32_0 : i32, i32, i32
  }
  func.func @transform_3(%arg0: i32, %arg1: i32) -> (i32, i32, i32) {
    %c0_i32 = arith.constant 0 : i32
    %c0_i32_0 = arith.constant 0 : i32
    return %arg0, %arg1, %c0_i32 : i32, i32, i32
  }
  func.func @transform_4(%arg0: i32, %arg1: i32) -> (i32, i32, i32) {
    %c0_i32 = arith.constant 0 : i32
    %c0_i32_0 = arith.constant 0 : i32
    return %arg0, %arg1, %c0_i32 : i32, i32, i32
  }
}

</mosaic_0001>

<llo_original>
// kernel: tpu_custom_call.1
$region0: #{tpu_custom_call.1}
  #allocation0 [shape = 'u32[]', space=smem, size = 0x4, offset = 0x4, fixed_abs, tag = 'smem constant byte address 0x4 - core index']
  #allocation1 [shape = 'u32[144,128]{1,0:T(1,128)}', space=vmem, size = 0x12000, scoped, tag = 'internal scratch']
  %s0 = inlined_call_operand.hbm [shape: f32[2,32,128], index: 0, kind: input, shape index: {}]
  %s1 = inlined_call_operand.hbm [shape: bf16[2,128,128], index: 1, kind: input, shape index: {}]
  %s2 = inlined_call_operand.hbm [shape: bf16[2,128,128], index: 2, kind: input, shape index: {}]
  %s3 = inlined_call_operand.hbm [shape: f32[2,32,128], index: 3, kind: output, shape index: {0}]
  %s4 = inlined_call_operand.hbm [shape: bf16[2,32,128], index: 4, kind: output, shape index: {1}]
  %5 = xla_tuple %s3, %s4
  %s6 = sld [smem:[#allocation0]]
  $region65: #{tpu_custom_call.1} parent=0
    _
  %s8 = ssub.s32 1, %s6
  %s9 = scalar_select 0, %s8, %s6
  $region1: #{tpu_custom_call.1} parent=0
    #allocation2 [shape = 'u8[32768]{0}', space=vmem, size = 0x8000, scoped, tag = 'input window, operand 0']
    #allocation3 [shape = 's32[2]{0}', space=sflag, size = 0x8, scoped, tag = 'scoped memory for tpu_custom_call.1']
    #allocation4 [shape = 's32[2]{0}', space=sflag, size = 0x8, scoped, tag = 'scoped memory for tpu_custom_call.1']
    #allocation5 [shape = 'u8[65536]{0}', space=vmem, size = 0x10000, scoped, tag = 'input window, operand 1']
    #allocation6 [shape = 's32[2]{0}', space=sflag, size = 0x8, scoped, tag = 'scoped memory for tpu_custom_call.1']
    #allocation7 [shape = 'u8[65536]{0}', space=vmem, size = 0x10000, scoped, tag = 'input window, operand 2']
    #allocation8 [shape = 'u8[32768]{0}', space=vmem, size = 0x8000, scoped, tag = 'output window, operand 0']
    #allocation9 [shape = 'u8[16384]{0}', space=vmem, size = 0x4000, scoped, tag = 'output window, operand 1']
    #allocation10 [shape = 's32[2]{0}', space=sflag, size = 0x8, scoped, tag = 'scoped memory for tpu_custom_call.1']
    %10 = vsyncpa [#allocation3], 0
    %s11 = scalar_lea.sflag [#allocation3], 1
    %12 = vsyncpa %s11, 0
    %13 = vsyncpa [#allocation6], 0
    %s14 = scalar_lea.sflag [#allocation6], 1
    %15 = vsyncpa %s14, 0
    %16 = vsyncpa [#allocation4], 0
    %s17 = scalar_lea.sflag [#allocation4], 1
    %18 = vsyncpa %s17, 0
    %19 = vsyncpa [#allocation10], 0
    %s20 = scalar_lea.sflag [#allocation10], 1
    %21 = vsyncpa %s20, 0
    loop: start=0, step=1, limit=4
    $region2: #{tpu_custom_call.1} parent=1 // loop_pre_header
      _
    $region3: #{tpu_custom_call.1} parent=1 // loop_header
      %s23 = sphi 0, %s27
      %p24 = scmp.ge.s32.totalorder %s23, 4
      %s30 = sphi 0, %s42
      %s31 = sphi 0, %s38
      %s32 = sphi 0, %s30
      %s33 = sphi 0, %s31
      %s34 = sphi 0, %s32
      %s35 = sphi 0, %s33
      %s47 = sphi 0, %s49
      %s50 = sphi 0, %s47
      %s51 = sphi 0, %s50
      %s67 = sphi 0, %s51
      %s73 = sphi 0, %s75
      %s76 = sphi 0, %s73
      %s77 = sphi 0, %s76
      %s93 = sphi 0, %s77
      %s99 = sphi 0, %s101
      %s102 = sphi 0, %s99
      %s103 = sphi 0, %s102
      %s119 = sphi 0, %s103
      %s127 = sphi 0, %s129
      %s130 = sphi 0, %s127
      %s131 = sphi 0, %s130
      %s147 = sphi 0, %s131
      %s155 = sphi 0, %s157
      %s158 = sphi 0, %s155
      %s159 = sphi 0, %s158
      %s175 = sphi 0, %s159
    $region4: #{tpu_custom_call.1} parent=1 // loop_header_branch
      %26 = sbr.rel (%p24) target = $region8
    $region5: #{tpu_custom_call.1} parent=1 // loop_body
      %s28 = ssub.s32 %s23, 1
      %s29 = ssub.s32 %s23, 2
      %s36 = sadd.s32 1, %s31
      %p37 = scmp.ge.s32.totalorder %s36, 1
      %s38 = scalar_select %p37, 0, %s36
      %s39 = sadd.s32 1, %s30
      %s40 = scalar_select %p37, %s39, %s30
      %p41 = scmp.ge.s32.totalorder %s40, 2
      %s42 = scalar_select %p41, 0, %s40
      %s43 = ssub.s32 %s30, %s42
      %s44 = ssub.s32 %s31, %s38
      %s45 = sor.u32 %s43, %s44
      %p46 = scmp.eq.s32.totalorder %s45, 0
      %s48 = sadd.s32 %s47, 1
      %s49 = scalar_select %p46, %s47, %s48
      %p52 = pneg %p46
      %p53 = scmp.eq.s32.totalorder %s23, 1
      %p54 = por %p52, %p53
      %p55 = scmp.ne.s32.totalorder %s47, %s50
      %p56 = scmp.eq.s32.totalorder %s23, 0
      %p57 = por %p55, %p56
      %p58 = scmp.ne.s32.totalorder %s47, %s50
      %p59 = scmp.eq.s32.totalorder %s28, 1
      %p60 = por %p58, %p59
      %p61 = scmp.ne.s32.totalorder %s50, %s51
      %p62 = scmp.eq.s32.totalorder %s28, 0
      %p63 = por %p61, %p62
      %p64 = scmp.ne.s32.totalorder %s50, %s51
      %p65 = scmp.eq.s32.totalorder %s29, 1
      %p66 = por %p64, %p65
      %p68 = scmp.ne.s32.totalorder %s51, %s67
      %p69 = scmp.eq.s32.totalorder %s29, 0
      %p70 = por %p68, %p69
      %s71 = ssub.s32 %s30, %s42
      %p72 = scmp.eq.s32.totalorder %s71, 0
      %s74 = sadd.s32 %s73, 1
      %s75 = scalar_select %p72, %s73, %s74
      %p78 = pneg %p72
      %p79 = scmp.eq.s32.totalorder %s23, 1
      %p80 = por %p78, %p79
      %p81 = scmp.ne.s32.totalorder %s73, %s76
      %p82 = scmp.eq.s32.totalorder %s23, 0
      %p83 = por %p81, %p82
      %p84 = scmp.ne.s32.totalorder %s73, %s76
      %p85 = scmp.eq.s32.totalorder %s28, 1
      %p86 = por %p84, %p85
      %p87 = scmp.ne.s32.totalorder %s76, %s77
      %p88 = scmp.eq.s32.totalorder %s28, 0
      %p89 = por %p87, %p88
      %p90 = scmp.ne.s32.totalorder %s76, %s77
      %p91 = scmp.eq.s32.totalorder %s29, 1
      %p92 = por %p90, %p91
      %p94 = scmp.ne.s32.totalorder %s77, %s93
      %p95 = scmp.eq.s32.totalorder %s29, 0
      %p96 = por %p94, %p95
      %s97 = ssub.s32 %s30, %s42
      %p98 = scmp.eq.s32.totalorder %s97, 0
      %s100 = sadd.s32 %s99, 1
      %s101 = scalar_select %p98, %s99, %s100
      %p104 = pneg %p98
      %p105 = scmp.eq.s32.totalorder %s23, 1
      %p106 = por %p104, %p105
      %p107 = scmp.ne.s32.totalorder %s99, %s102
      %p108 = scmp.eq.s32.totalorder %s23, 0
      %p109 = por %p107, %p108
      %p110 = scmp.ne.s32.totalorder %s99, %s102
      %p111 = scmp.eq.s32.totalorder %s28, 1
      %p112 = por %p110, %p111
      %p113 = scmp.ne.s32.totalorder %s102, %s103
      %p114 = scmp.eq.s32.totalorder %s28, 0
      %p115 = por %p113, %p114
      %p116 = scmp.ne.s32.totalorder %s102, %s103
      %p117 = scmp.eq.s32.totalorder %s29, 1
      %p118 = por %p116, %p117
      %p120 = scmp.ne.s32.totalorder %s103, %s119
      %p121 = scmp.eq.s32.totalorder %s29, 0
      %p122 = por %p120, %p121
      %s123 = ssub.s32 %s30, %s42
      %s124 = ssub.s32 %s31, %s38
      %s125 = sor.u32 %s123, %s124
      %p126 = scmp.eq.s32.totalorder %s125, 0
      %s128 = sadd.s32 %s127, 1
      %s129 = scalar_select %p126, %s127, %s128
      %p132 = pneg %p126
      %p133 = scmp.eq.s32.totalorder %s23, 1
      %p134 = por %p132, %p133
      %p135 = scmp.ne.s32.totalorder %s127, %s130
      %p136 = scmp.eq.s32.totalorder %s23, 0
      %p137 = por %p135, %p136
      %p138 = scmp.ne.s32.totalorder %s127, %s130
      %p139 = scmp.eq.s32.totalorder %s28, 1
      %p140 = por %p138, %p139
      %p141 = scmp.ne.s32.totalorder %s130, %s131
      %p142 = scmp.eq.s32.totalorder %s28, 0
      %p143 = por %p141, %p142
      %p144 = scmp.ne.s32.totalorder %s130, %s131
      %p145 = scmp.eq.s32.totalorder %s29, 1
      %p146 = por %p144, %p145
      %p148 = scmp.ne.s32.totalorder %s131, %s147
      %p149 = scmp.eq.s32.totalorder %s29, 0
      %p150 = por %p148, %p149
      %s151 = ssub.s32 %s30, %s42
      %s152 = ssub.s32 %s31, %s38
      %s153 = sor.u32 %s151, %s152
      %p154 = scmp.eq.s32.totalorder %s153, 0
      %s156 = sadd.s32 %s155, 1
      %s157 = scalar_select %p154, %s155, %s156
      %p160 = pneg %p154
      %p161 = scmp.eq.s32.totalorder %s23, 1
      %p162 = por %p160, %p161
      %p163 = scmp.ne.s32.totalorder %s155, %s158
      %p164 = scmp.eq.s32.totalorder %s23, 0
      %p165 = por %p163, %p164
      %p166 = scmp.ne.s32.totalorder %s155, %s158
      %p167 = scmp.eq.s32.totalorder %s28, 1
      %p168 = por %p166, %p167
      %p169 = scmp.ne.s32.totalorder %s158, %s159
      %p170 = scmp.eq.s32.totalorder %s28, 0
      %p171 = por %p169, %p170
      %p172 = scmp.ne.s32.totalorder %s158, %s159
      %p173 = scmp.eq.s32.totalorder %s29, 1
      %p174 = por %p172, %p173
      %p176 = scmp.ne.s32.totalorder %s159, %s175
      %p177 = scmp.eq.s32.totalorder %s29, 0
      %p178 = por %p176, %p177
      %p179 = scmp.le.s32.totalorder 1, %s23
      %p180 = scmp.lt.s32.totalorder %s23, 3
      %p181 = pnand %p179, %p180
      %p182 = pneg %p181
      // Predicated region
      $region9: #{tpu_custom_call.1} parent=5 // pred_check
        _
      $region10: #{tpu_custom_call.1} parent=5 // pred_check_branch
        %184 = sbr.rel (%p181) target = $region12
      $region11: #{tpu_custom_call.1} parent=5 // pred_region
        %s185 = ssub.s32 %s23, 1
      $region12: #{tpu_custom_call.1} parent=5 // pred_fallthru
        _
      %p186 = scmp.lt.s32.totalorder %s23, 2
      // Predicated region
      $region13: #{tpu_custom_call.1} parent=5 // pred_check
        %p187 = pneg %p186
      $region14: #{tpu_custom_call.1} parent=5 // pred_check_branch
        %189 = sbr.rel (%p187) target = $region16
      $region15: #{tpu_custom_call.1} parent=5 // pred_region
        // Predicated region
        $region17: #{tpu_custom_call.1} parent=15 // pred_check
          %p190 = pneg %p57
        $region18: #{tpu_custom_call.1} parent=15 // pred_check_branch
          %192 = sbr.rel (%p190) target = $region20
        $region19: #{tpu_custom_call.1} parent=15 // pred_region
          %s193 = sand.u32 %s47, 1
          %s194 = scalar_lea.sflag [#allocation3], %s193
          %s195 = sand.u32 %s47, 1
          %s196 = smul.addr %s195, 32
          %s197 = scalar_lea.vmem [#allocation2], %s196
          %s198 = smul.u32 4, %s31
          %s200 = ssub.s32 512, 512
          %201 = vsyncadd %s194, %s200
          %s202 = smul.addr %s30, 4
          %s203 = sadd.s32 %s198, %s202
          %s204 = smul.addr %s203, 128
          %s205 = scalar_lea.hbm %s0, %s204
          %s206 = sshll.u32 %s197, 4
          %s207 = int_to_ptr.vmem [resolvable:$true] %s206
          %212 = dma.hbm_to_vmem [thread:$0]  %s205, 512, %s207, %s194, 128, 128, 8
        $region20: #{tpu_custom_call.1} parent=15 // pred_fallthru
          _
        // Predicated region
        $region21: #{tpu_custom_call.1} parent=15 // pred_check
          %p213 = pneg %p83
        $region22: #{tpu_custom_call.1} parent=15 // pred_check_branch
          %215 = sbr.rel (%p213) target = $region24
        $region23: #{tpu_custom_call.1} parent=15 // pred_region
          %s216 = sand.u32 %s23, 1
          %s217 = scalar_lea.sflag [#allocation6], %s216
          %s218 = sand.u32 %s73, 1
          %s219 = smul.addr %s218, 64
          %s220 = scalar_lea.vmem [#allocation5], %s219
          %s222 = ssub.s32 1024, 1024
          %223 = vsyncadd %s217, %s222
          %s224 = smul.addr %s30, 16
          %s225 = smul.addr %s224, 64
          %s226 = scalar_lea.hbm %s1, %s225
          %s227 = sshll.u32 %s220, 4
          %s228 = int_to_ptr.vmem [resolvable:$true] %s227
          %233 = dma.hbm_to_vmem [thread:$0]  %s226, 1024, %s228, %s217, 64, 64, 4
        $region24: #{tpu_custom_call.1} parent=15 // pred_fallthru
          _
        // Predicated region
        $region25: #{tpu_custom_call.1} parent=15 // pred_check
          %p234 = pneg %p109
        $region26: #{tpu_custom_call.1} parent=15 // pred_check_branch
          %236 = sbr.rel (%p234) target = $region28
        $region27: #{tpu_custom_call.1} parent=15 // pred_region
          %s237 = sand.u32 %s23, 1
          %s238 = scalar_lea.sflag [#allocation6], %s237
          %s239 = sand.u32 %s99, 1
          %s240 = smul.addr %s239, 64
          %s241 = scalar_lea.vmem [#allocation7], %s240
          %s243 = ssub.s32 1024, 1024
          %244 = vsyncadd %s238, %s243
          %s245 = smul.addr %s30, 16
          %s246 = smul.addr %s245, 64
          %s247 = scalar_lea.hbm %s2, %s246
          %s248 = sshll.u32 %s241, 4
          %s249 = int_to_ptr.vmem [resolvable:$true] %s248
          %254 = dma.hbm_to_vmem [thread:$0]  %s247, 1024, %s249, %s238, 64, 64, 4
        $region28: #{tpu_custom_call.1} parent=15 // pred_fallthru
          _
      $region16: #{tpu_custom_call.1} parent=5 // pred_fallthru
        _
      %p255 = scmp.le.s32.totalorder 1, %s23
      %p256 = scmp.lt.s32.totalorder %s23, 3
      %p257 = pnand %p255, %p256
      %p258 = pneg %p257
      // Predicated region
      $region29: #{tpu_custom_call.1} parent=5 // pred_check
        _
      $region30: #{tpu_custom_call.1} parent=5 // pred_check_branch
        %260 = sbr.rel (%p257) target = $region32
      $region31: #{tpu_custom_call.1} parent=5 // pred_region
        %s261 = ssub.s32 %s23, 1
        %s262 = sand.u32 %s50, 1
        %s263 = scalar_lea.sflag [#allocation3], %s262
        %s264 = sand.u32 %s50, 1
        %s265 = smul.addr %s264, 32
        %s266 = scalar_lea.vmem [#allocation2], %s265
        // Predicated region
        $region33: #{tpu_custom_call.1} parent=31 // pred_check
          %p267 = pneg %p63
        $region34: #{tpu_custom_call.1} parent=31 // pred_check_branch
          %269 = sbr.rel (%p267) target = $region36
        $region35: #{tpu_custom_call.1} parent=31 // pred_region
          %270 = dma.done %s263, 512
        $region36: #{tpu_custom_call.1} parent=31 // pred_fallthru
          _
        %s271 = sand.u32 %s28, 1
        %s272 = scalar_lea.sflag [#allocation6], %s271
        %s273 = sand.u32 %s76, 1
        %s274 = smul.addr %s273, 64
        %s275 = scalar_lea.vmem [#allocation5], %s274
        // Predicated region
        $region37: #{tpu_custom_call.1} parent=31 // pred_check
          %p276 = pneg %p89
        $region38: #{tpu_custom_call.1} parent=31 // pred_check_branch
          %278 = sbr.rel (%p276) target = $region40
        $region39: #{tpu_custom_call.1} parent=31 // pred_region
          %279 = dma.done %s272, 1024
        $region40: #{tpu_custom_call.1} parent=31 // pred_fallthru
          _
        %s280 = sand.u32 %s28, 1
        %s281 = scalar_lea.sflag [#allocation6], %s280
        %s282 = sand.u32 %s102, 1
        %s283 = smul.addr %s282, 64
        %s284 = scalar_lea.vmem [#allocation7], %s283
        // Predicated region
        $region41: #{tpu_custom_call.1} parent=31 // pred_check
          %p285 = pneg %p115
        $region42: #{tpu_custom_call.1} parent=31 // pred_check_branch
          %287 = sbr.rel (%p285) target = $region44
        $region43: #{tpu_custom_call.1} parent=31 // pred_region
          %288 = dma.done %s281, 1024
        $region44: #{tpu_custom_call.1} parent=31 // pred_fallthru
          _
        %s289 = sand.u32 %s50, 1
        %s290 = scalar_lea.sflag [#allocation3], %s289
        %s291 = sand.u32 %s50, 1
        %s292 = smul.addr %s291, 32
        %s293 = scalar_lea.vmem [#allocation2], %s292
        %p294 = pneg %p63
        %p295 = pneg %p60
        %s296 = sand.u32 %s28, 1
        %s297 = scalar_lea.sflag [#allocation6], %s296
        %s298 = sand.u32 %s76, 1
        %s299 = smul.addr %s298, 64
        %s300 = scalar_lea.vmem [#allocation5], %s299
        %p301 = pneg %p89
        %p302 = pneg %p86
        %s303 = sand.u32 %s28, 1
        %s304 = scalar_lea.sflag [#allocation6], %s303
        %s305 = sand.u32 %s102, 1
        %s306 = smul.addr %s305, 64
        %s307 = scalar_lea.vmem [#allocation7], %s306
        %p308 = pneg %p115
        %p309 = pneg %p112
        %p310 = pneg %p143
        %p311 = pneg %p140
        %s312 = sand.u32 %s130, 1
        %s313 = scalar_lea.sflag [#allocation4], %s312
        %s314 = sand.u32 %s130, 1
        %s315 = smul.addr %s314, 32
        %s316 = scalar_lea.vmem [#allocation8], %s315
        %p317 = pneg %p171
        %p318 = pneg %p168
        %s319 = sand.u32 %s158, 1
        %s320 = scalar_lea.sflag [#allocation10], %s319
        %s321 = sand.u32 %s158, 1
        %s322 = smul.addr %s321, 16
        %s323 = scalar_lea.vmem [#allocation9], %s322
        %s324 = smul.u32 4, %s33
        %s325 = smul.u32 4, %s33
        %s326 = smul.u32 4, %s33
        %v328 = vld [vmem:[%s266] sm:$0xff]
        %v329 = vld [vmem:[%s266 + $0x8] sm:$0xff]
        %v330 = vld [vmem:[%s266 + $0x10] sm:$0xff]
        %v331 = vld [vmem:[%s266 + $0x18] sm:$0xff]
        %v332 = vmul.f32 %v328, 0.17677669
        %v333 = vmul.f32 %v329, 0.17677669
        %v334 = vmul.f32 %v330, 0.17677669
        %v335 = vmul.f32 %v331, 0.17677669
        %v336 = vpack.c.bf16 %v333, %v332
        %v337 = vpack.c.bf16 %v335, %v334
        %v338 = vld [vmem:[%s275] sm:$0xf]
        %v339 = vld [vmem:[%s275 + $0x4] sm:$0xf]
        %v340 = vld [vmem:[%s275 + $0x8] sm:$0xf]
        %v341 = vld [vmem:[%s275 + $0xc] sm:$0xf]
        %v342 = vld [vmem:[%s275 + $0x10] sm:$0xf]
        %v343 = vld [vmem:[%s275 + $0x14] sm:$0xf]
        %v344 = vld [vmem:[%s275 + $0x18] sm:$0xf]
        %v345 = vld [vmem:[%s275 + $0x1c] sm:$0xf]
        %v346 = vld [vmem:[%s275 + $0x20] sm:$0xf]
        %v347 = vld [vmem:[%s275 + $0x24] sm:$0xf]
        %v348 = vld [vmem:[%s275 + $0x28] sm:$0xf]
        %v349 = vld [vmem:[%s275 + $0x2c] sm:$0xf]
        %v350 = vld [vmem:[%s275 + $0x30] sm:$0xf]
        %v351 = vld [vmem:[%s275 + $0x34] sm:$0xf]
        %v352 = vld [vmem:[%s275 + $0x38] sm:$0xf]
        %v353 = vld [vmem:[%s275 + $0x3c] sm:$0xf]
        %v354 = vld [vmem:[%s284] sm:$0xf]
        %v355 = vld [vmem:[%s284 + $0x4] sm:$0xf]
        %v356 = vld [vmem:[%s284 + $0x8] sm:$0xf]
        %v357 = vld [vmem:[%s284 + $0xc] sm:$0xf]
        %v358 = vld [vmem:[%s284 + $0x10] sm:$0xf]
        %v359 = vld [vmem:[%s284 + $0x14] sm:$0xf]
        %v360 = vld [vmem:[%s284 + $0x18] sm:$0xf]
        %v361 = vld [vmem:[%s284 + $0x1c] sm:$0xf]
        %v362 = vld [vmem:[%s284 + $0x20] sm:$0xf]
        %v363 = vld [vmem:[%s284 + $0x24] sm:$0xf]
        %v364 = vld [vmem:[%s284 + $0x28] sm:$0xf]
        %v365 = vld [vmem:[%s284 + $0x2c] sm:$0xf]
        %v366 = vld [vmem:[%s284 + $0x30] sm:$0xf]
        %v367 = vld [vmem:[%s284 + $0x34] sm:$0xf]
        %v368 = vld [vmem:[%s284 + $0x38] sm:$0xf]
        %v369 = vld [vmem:[%s284 + $0x3c] sm:$0xf]
        %v370 = vlaneseq
        %v371 = vand.u32 %v370, 127
        %vm372 = vcmp.lt.s32.totalorder %v371, 8
        %v373 = vsel %vm372, 0.0, -1e+30
        %v390 = vunpack.c.l.b16 %v338
        %v391 = vunpack.c.l.b16 %v339
        %v392 = vunpack.c.l.b16 %v340
        %v393 = vunpack.c.l.b16 %v341
        %v394 = vunpack.c.l.b16 %v342
        %v395 = vunpack.c.l.b16 %v343
        %v396 = vunpack.c.l.b16 %v344
        %v397 = vunpack.c.l.b16 %v345
        %v398 = vunpack.c.l.b16 %v346
        %v399 = vunpack.c.l.b16 %v347
        %v400 = vunpack.c.l.b16 %v348
        %v401 = vunpack.c.l.b16 %v349
        %v402 = vunpack.c.l.b16 %v350
        %v403 = vunpack.c.l.b16 %v351
        %v404 = vunpack.c.l.b16 %v352
        %v405 = vunpack.c.l.b16 %v353
        %v406 = vpack.c.b16 %v391, %v390
        %v407 = vpack.c.b16 %v393, %v392
        %v408 = vpack.c.b16 %v395, %v394
        %v409 = vpack.c.b16 %v397, %v396
        %v410 = vpack.c.b16 %v399, %v398
        %v411 = vpack.c.b16 %v401, %v400
        %v412 = vpack.c.b16 %v403, %v402
        %v413 = vpack.c.b16 %v405, %v404
        %422 = vmatprep.subr.bf16.mxu0 0
        %423 = vmatpush1.bf16.xpose.msra.mxu0 %v406
        %424 = vmatprep.subr.bf16.mxu0 0
        %425 = vmatpush1.bf16.xpose.msra.mxu0 %v407
        %426 = vmatprep.subr.bf16.mxu0 0
        %427 = vmatpush1.bf16.xpose.msra.mxu0 %v408
        %428 = vmatprep.subr.bf16.mxu0 0
        %429 = vmatpush1.bf16.xpose.msra.mxu0 %v409
        %430 = vmatprep.subr.bf16.mxu0 0
        %431 = vmatpush1.bf16.xpose.msra.mxu0 %v410
        %432 = vmatprep.subr.bf16.mxu0 0
        %433 = vmatpush1.bf16.xpose.msra.mxu0 %v411
        %434 = vmatprep.subr.bf16.mxu0 0
        %435 = vmatpush1.bf16.xpose.msra.mxu0 %v412
        %436 = vmatprep.subr.bf16.mxu0 0
        %437 = vmatpush1.bf16.xpose.msra.mxu0 %v413
        %438 = vmatprep.subr.bf16.mxu0 0
        %439 = vmatpush1.bf16.xpose.msra.mxu0 0
        %440 = vmatprep.subr.bf16.mxu0 0
        %441 = vmatpush1.bf16.xpose.msra.mxu0 0
        %442 = vmatprep.subr.bf16.mxu0 0
        %443 = vmatpush1.bf16.xpose.msra.mxu0 0
        %444 = vmatprep.subr.bf16.mxu0 0
        %445 = vmatpush1.bf16.xpose.msra.mxu0 0
        %446 = vmatprep.subr.bf16.mxu0 0
        %447 = vmatpush1.bf16.xpose.msra.mxu0 0
        %448 = vmatprep.subr.bf16.mxu0 0
        %449 = vmatpush1.bf16.xpose.msra.mxu0 0
        %450 = vmatprep.subr.bf16.mxu0 0
        %451 = vmatpush1.bf16.xpose.msra.mxu0 0
        %452 = vmatprep.subr.bf16.mxu0 0
        %453 = vmatpush1.bf16.xpose.msra.mxu0 0
        %454 = vmatprep.mubr.bf16.mxu0 0
        %455 = vmatmul.mubr.bf16.gmra.mrb[0].mxu0 %v336
        %v456 = vpop.f32.mrb[0].mxu0
        %v457 = vadd.f32 %v373, %v456
        %v458 = vpop.f32.mrb[0].mxu0
        %v459 = vpop.f32.mrb[0].mxu0
        %v460 = vadd.f32 %v373, %v459
        %v461 = vpop.f32.mrb[0].mxu0
        %462 = vmatprep.mubr.bf16.mxu0 0
        %463 = vmatmul.mubr.bf16.gmra.mrb[0].mxu0 %v337
        %v464 = vpop.f32.mrb[0].mxu0
        %v465 = vadd.f32 %v373, %v464
        %v466 = vpop.f32.mrb[0].mxu0
        %v467 = vpop.f32.mrb[0].mxu0
        %v468 = vadd.f32 %v373, %v467
        %v469 = vpop.f32.mrb[0].mxu0
        %470 = vdwg.mxu0
        %471 = vmax.xlane.f32.xlu0 %v457
        %v472 = vpop.xlane.xlu0 %471
        %473 = vmax.xlane.f32.xlu0 %v460
        %v474 = vpop.xlane.xlu0 %473
        %475 = vmax.xlane.f32.xlu0 %v465
        %v476 = vpop.xlane.xlu0 %475
        %477 = vmax.xlane.f32.xlu0 %v468
        %v478 = vpop.xlane.xlu0 %477
        %v479 = vsub.f32 %v457, %v472
        %v480 = vsub.f32 %v460, %v474
        %v481 = vsub.f32 %v465, %v476
        %v482 = vsub.f32 %v468, %v478
        %v483 = vmul.f32 %v479, 1.442695
        %v484 = vpow.pop %v483
        %v485 = vmul.f32 %v480, 1.442695
        %v486 = vpow.pop %v485
        %v487 = vmul.f32 %v481, 1.442695
        %v488 = vpow.pop %v487
        %v489 = vmul.f32 %v482, 1.442695
        %v490 = vpow.pop %v489
        %491 = vadd.xlane.f32.xlu0 %v484
        %v492 = vpop.xlane.xlu0 %491
        %493 = vadd.xlane.f32.xlu0 %v486
        %v494 = vpop.xlane.xlu0 %493
        %495 = vadd.xlane.f32.xlu0 %v488
        %v496 = vpop.xlane.xlu0 %495
        %497 = vadd.xlane.f32.xlu0 %v490
        %v498 = vpop.xlane.xlu0 %497
        %v499 = vrcp.pop %v492
        %v500 = vmul.f32 %v484, %v499
        %v501 = vrcp.pop %v494
        %v502 = vmul.f32 %v486, %v501
        %v503 = vrcp.pop %v496
        %v504 = vmul.f32 %v488, %v503
        %v505 = vrcp.pop %v498
        %v506 = vmul.f32 %v490, %v505
        %v507 = vpack.c.bf16 %v502, %v500
        %v508 = vpack.c.bf16 %v506, %v504
        %v511 = vunpack.c.l.b16 %v507
        %v512 = vunpack.c.h.b16 %v507
        %v513 = vunpack.c.l.b16 %v508
        %v514 = vunpack.c.h.b16 %v508
        %v515 = vpack.c.b16 %v511, %v511
        %v516 = vpack.c.b16 %v512, %v512
        %v517 = vpack.c.b16 %v513, %v513
        %v518 = vpack.c.b16 %v514, %v514
        %523 = vst [vmem:[%s323] sm:$0xf] %v515
        %524 = vst [vmem:[%s323 + $0x4] sm:$0xf] %v516
        %525 = vst [vmem:[%s323 + $0x8] sm:$0xf] %v517
        %526 = vst [vmem:[%s323 + $0xc] sm:$0xf] %v518
        %v543 = vunpack.c.l.b16 %v354
        %v544 = vunpack.c.l.b16 %v355
        %v545 = vunpack.c.l.b16 %v356
        %v546 = vunpack.c.l.b16 %v357
        %v547 = vunpack.c.l.b16 %v358
        %v548 = vunpack.c.l.b16 %v359
        %v549 = vunpack.c.l.b16 %v360
        %v550 = vunpack.c.l.b16 %v361
        %v551 = vunpack.c.l.b16 %v362
        %v552 = vunpack.c.l.b16 %v363
        %v553 = vunpack.c.l.b16 %v364
        %v554 = vunpack.c.l.b16 %v365
        %v555 = vunpack.c.l.b16 %v366
        %v556 = vunpack.c.l.b16 %v367
        %v557 = vunpack.c.l.b16 %v368
        %v558 = vunpack.c.l.b16 %v369
        %v559 = vpack.c.b16 %v544, %v543
        %v560 = vpack.c.b16 %v546, %v545
        %v561 = vpack.c.b16 %v548, %v547
        %v562 = vpack.c.b16 %v550, %v549
        %v563 = vpack.c.b16 %v552, %v551
        %v564 = vpack.c.b16 %v554, %v553
        %v565 = vpack.c.b16 %v556, %v555
        %v566 = vpack.c.b16 %v558, %v557
        %575 = vmatprep.subr.bf16.mxu0 0
        %576 = vmatpush1.bf16.msra.mxu0 %v559
        %577 = vmatprep.subr.bf16.mxu0 0
        %578 = vmatpush1.bf16.msra.mxu0 %v560
        %579 = vmatprep.subr.bf16.mxu0 0
        %580 = vmatpush1.bf16.msra.mxu0 %v561
        %581 = vmatprep.subr.bf16.mxu0 0
        %582 = vmatpush1.bf16.msra.mxu0 %v562
        %583 = vmatprep.subr.bf16.mxu0 0
        %584 = vmatpush1.bf16.msra.mxu0 %v563
        %585 = vmatprep.subr.bf16.mxu0 0
        %586 = vmatpush1.bf16.msra.mxu0 %v564
        %587 = vmatprep.subr.bf16.mxu0 0
        %588 = vmatpush1.bf16.msra.mxu0 %v565
        %589 = vmatprep.subr.bf16.mxu0 0
        %590 = vmatpush1.bf16.msra.mxu0 %v566
        %591 = vmatprep.subr.bf16.mxu0 0
        %592 = vmatpush1.bf16.msra.mxu0 0
        %593 = vmatprep.subr.bf16.mxu0 0
        %594 = vmatpush1.bf16.msra.mxu0 0
        %595 = vmatprep.subr.bf16.mxu0 0
        %596 = vmatpush1.bf16.msra.mxu0 0
        %597 = vmatprep.subr.bf16.mxu0 0
        %598 = vmatpush1.bf16.msra.mxu0 0
        %599 = vmatprep.subr.bf16.mxu0 0
        %600 = vmatpush1.bf16.msra.mxu0 0
        %601 = vmatprep.subr.bf16.mxu0 0
        %602 = vmatpush1.bf16.msra.mxu0 0
        %603 = vmatprep.subr.bf16.mxu0 0
        %604 = vmatpush1.bf16.msra.mxu0 0
        %605 = vmatprep.subr.bf16.mxu0 0
        %606 = vmatpush1.bf16.msra.mxu0 0
        %607 = vmatprep.mubr.bf16.mxu0 0
        %608 = vmatmul.mubr.bf16.gmra.mrb[0].mxu0 %v507
        %v609 = vpop.f32.mrb[0].mxu0
        %v610 = vadd.f32 0.0, %v609
        %v611 = vpop.f32.mrb[0].mxu0
        %v612 = vpop.f32.mrb[0].mxu0
        %v613 = vadd.f32 0.0, %v612
        %v614 = vpop.f32.mrb[0].mxu0
        %615 = vmatprep.mubr.bf16.mxu0 0
        %616 = vmatmul.mubr.bf16.gmra.mrb[0].mxu0 %v508
        %v617 = vpop.f32.mrb[0].mxu0
        %v618 = vadd.f32 0.0, %v617
        %v619 = vpop.f32.mrb[0].mxu0
        %v620 = vpop.f32.mrb[0].mxu0
        %v621 = vadd.f32 0.0, %v620
        %v622 = vpop.f32.mrb[0].mxu0
        %623 = vdwg.mxu0
        %624 = vst [vmem:[%s316] sm:$0xff] %v610
        %625 = vst [vmem:[%s316 + $0x8] sm:$0xff] %v613
        %626 = vst [vmem:[%s316 + $0x10] sm:$0xff] %v618
        %627 = vst [vmem:[%s316 + $0x18] sm:$0xff] %v621
        %s628 = sand.u32 %s130, 1
        %s629 = scalar_lea.sflag [#allocation4], %s628
        %s630 = sand.u32 %s130, 1
        %s631 = smul.addr %s630, 32
        %s632 = scalar_lea.vmem [#allocation8], %s631
        %s633 = sand.u32 %s158, 1
        %s634 = scalar_lea.sflag [#allocation10], %s633
        %s635 = sand.u32 %s158, 1
        %s636 = smul.addr %s635, 16
        %s637 = scalar_lea.vmem [#allocation9], %s636
        // Predicated region
        $region45: #{tpu_custom_call.1} parent=31 // pred_check
          %p638 = pneg %p140
        $region46: #{tpu_custom_call.1} parent=31 // pred_check_branch
          %640 = sbr.rel (%p638) target = $region48
        $region47: #{tpu_custom_call.1} parent=31 // pred_region
          %s641 = smul.u32 4, %s33
          %s643 = ssub.s32 512, 512
          %644 = vsyncadd %s629, %s643
          %s645 = smul.addr %s32, 4
          %s646 = sadd.s32 %s641, %s645
          %s647 = smul.addr %s646, 128
          %s648 = scalar_lea.hbm %s3, %s647
          %s649 = sshll.u32 %s632, 4
          %s650 = int_to_ptr.vmem [resolvable:$true] %s649
          %655 = dma.vmem_to_hbm [thread:$0]  %s650, 512, %s648, %s629, 128, 128, 8
        $region48: #{tpu_custom_call.1} parent=31 // pred_fallthru
          _
        // Predicated region
        $region49: #{tpu_custom_call.1} parent=31 // pred_check
          %p656 = pneg %p168
        $region50: #{tpu_custom_call.1} parent=31 // pred_check_branch
          %658 = sbr.rel (%p656) target = $region52
        $region51: #{tpu_custom_call.1} parent=31 // pred_region
          %s659 = smul.u32 4, %s33
          %s661 = ssub.s32 256, 256
          %662 = vsyncadd %s634, %s661
          %s663 = smul.addr %s32, 4
          %s664 = sadd.s32 %s659, %s663
          %s665 = smul.addr %s664, 64
          %s666 = scalar_lea.hbm %s4, %s665
          %s667 = sshll.u32 %s637, 4
          %s668 = int_to_ptr.vmem [resolvable:$true] %s667
          %673 = dma.vmem_to_hbm [thread:$0]  %s668, 256, %s666, %s634, 64, 64, 4
        $region52: #{tpu_custom_call.1} parent=31 // pred_fallthru
          _
      $region32: #{tpu_custom_call.1} parent=5 // pred_fallthru
        _
      %p674 = scmp.le.s32.totalorder 2, %s23
      // Predicated region
      $region53: #{tpu_custom_call.1} parent=5 // pred_check
        %p675 = pneg %p674
      $region54: #{tpu_custom_call.1} parent=5 // pred_check_branch
        %677 = sbr.rel (%p675) target = $region56
      $region55: #{tpu_custom_call.1} parent=5 // pred_region
        %s678 = ssub.s32 %s23, 2
        // Predicated region
        $region57: #{tpu_custom_call.1} parent=55 // pred_check
          %p679 = pneg %p146
        $region58: #{tpu_custom_call.1} parent=55 // pred_check_branch
          %681 = sbr.rel (%p679) target = $region60
        $region59: #{tpu_custom_call.1} parent=55 // pred_region
          %s682 = sand.u32 %s131, 1
          %s683 = scalar_lea.sflag [#allocation4], %s682
          %s684 = sand.u32 %s131, 1
          %s685 = smul.addr %s684, 32
          %s686 = scalar_lea.vmem [#allocation8], %s685
          %687 = dma.done %s683, 512
        $region60: #{tpu_custom_call.1} parent=55 // pred_fallthru
          _
        // Predicated region
        $region61: #{tpu_custom_call.1} parent=55 // pred_check
          %p688 = pneg %p174
        $region62: #{tpu_custom_call.1} parent=55 // pred_check_branch
          %690 = sbr.rel (%p688) target = $region64
        $region63: #{tpu_custom_call.1} parent=55 // pred_region
          %s691 = sand.u32 %s159, 1
          %s692 = scalar_lea.sflag [#allocation10], %s691
          %s693 = sand.u32 %s159, 1
          %s694 = smul.addr %s693, 16
          %s695 = scalar_lea.vmem [#allocation9], %s694
          %696 = dma.done %s692, 256
        $region64: #{tpu_custom_call.1} parent=55 // pred_fallthru
          _
      $region56: #{tpu_custom_call.1} parent=5 // pred_fallthru
        _
    $region6: #{tpu_custom_call.1} parent=1 // loop_footer
      %s27 = sadd.s32 1, %s23
    $region7: #{tpu_custom_call.1} parent=1 // loop_footer_branch
      %22 = sbr.rel target = $region3
    $region8: #{tpu_custom_call.1} parent=1 // loop_exit
      _
    %697 = vsyncpa [#allocation3], 1
    %s698 = scalar_lea.sflag [#allocation3], 1
    %699 = vsyncpa %s698, 1
    %700 = vsyncpa [#allocation6], 1
    %s701 = scalar_lea.sflag [#allocation6], 1
    %702 = vsyncpa %s701, 1
    %703 = vsyncpa [#allocation4], 1
    %s704 = scalar_lea.sflag [#allocation4], 1
    %705 = vsyncpa %s704, 1
    %706 = vsyncpa [#allocation10], 1
    %s707 = scalar_lea.sflag [#allocation10], 1
    %708 = vsyncpa %s707, 1

</llo_original>
